<compile_context>
chip_gen: v7x
topology: tpu7x:2x2x1
jax: 0.10.0
libtpu: 0.0.40
codegen_flags: <defaults>
</compile_context>

<pallas_src>
import functools

import jax
import jax.numpy as jnp
from jax.experimental import pallas as pl
from jax.experimental.pallas import tpu as pltpu

HIDDEN = 128
LANE = 128


def _round_up(v, m):
    return (v + m - 1) // m * m


def dqn_kernel(x_ref, w1_ref, b1_ref, w2_ref, b2_ref, w3_ref, b3_ref, o_ref, xw_ref):
    n_obs = x_ref.shape[-1]
    n_actions = o_ref.shape[-1]

    # Zero-extend the narrow observation tile into a lane-dense bf16 scratch so
    # the layer-1 matmul runs with a full 128-lane K (x stays unpadded in HBM).
    xw_ref[...] = jnp.zeros_like(xw_ref)
    xw_ref[:, :n_obs] = x_ref[...].astype(jnp.bfloat16)

    h1 = jnp.dot(xw_ref[...], w1_ref[...], preferred_element_type=jnp.float32)
    h1 = jnp.maximum(h1 + b1_ref[...], 0.0).astype(jnp.bfloat16)      # ReLU (VPU)

    h2 = jnp.dot(h1, w2_ref[...], preferred_element_type=jnp.float32)
    h2 = jnp.maximum(h2 + b2_ref[...], 0.0).astype(jnp.bfloat16)      # ReLU (VPU)

    q = jnp.dot(h2, w3_ref[...], preferred_element_type=jnp.float32)  # (tb, n_p)

    # Only the first n_actions lanes are real; add the (unpadded) bias and store
    # unpadded to HBM (masked vst, nearly free VMEM-side).
    o_ref[...] = q[:, :n_actions] + b3_ref[...]


def prepare_params(params):
    """One-time padding / casting of raw (in_features, out_features) params.

    Weights -> bf16 with K (layer 1) and N (layer 3) padded to multiples of 128.
    Biases stay f32; b3 stays unpadded so n_actions is recoverable from it.
    """
    w1, b1, w2, b2, w3, b3 = params
    n_obs = w1.shape[0]
    n_actions = w3.shape[1]
    k_p = _round_up(n_obs, LANE)
    n_p = _round_up(n_actions, LANE)

    w1_p = jnp.pad(w1, ((0, k_p - n_obs), (0, 0))).astype(jnp.bfloat16)
    w2_b = w2.astype(jnp.bfloat16)
    w3_p = jnp.pad(w3, ((0, 0), (0, n_p - n_actions))).astype(jnp.bfloat16)
    return (
        w1_p,
        b1.astype(jnp.float32),
        w2_b,
        b2.astype(jnp.float32),
        w3_p,
        b3.astype(jnp.float32),
    )


def _choose_batch_tile(batch, batch_tile):
    tb = min(batch_tile, _round_up(batch, 8))
    batch_p = _round_up(batch, tb)
    # Prefer >= 2 grid steps when there is enough work so the "parallel" batch
    # axis can shard across both TensorCores on v7x (one step idles a TC).
    if batch_p // tb == 1 and tb >= 16:
        tb = _round_up(tb // 2, 8)
        batch_p = _round_up(batch, tb)
    return tb, batch_p


@functools.partial(jax.jit, static_argnames=("batch_tile",))
def dqn_forward(x, prepared_params, *, batch_tile=2048):
    """Q-values for a batch of observations. x: (batch, n_observations) f32."""
    w1_p, b1, w2, b2, w3_p, b3 = prepared_params
    batch, n_obs = x.shape
    k_p, hidden = w1_p.shape
    n_p = w3_p.shape[1]
    n_actions = b3.shape[1]

    tb, batch_p = _choose_batch_tile(batch, batch_tile)
    grid = (batch_p // tb,)

    x_p = x if batch_p == batch else jnp.pad(x, ((0, batch_p - batch), (0, 0)))

    # Constant index map => weights/biases are VMEM-resident, never re-DMA'd.
    def const_spec(shape):
        return pl.BlockSpec(shape, lambda i: (0, 0))

    flops = 2 * batch * (n_obs * hidden + hidden * hidden + hidden * n_actions)
    bytes_accessed = (
        4 * x.size                                   # streamed f32 input
        + 2 * (w1_p.size + w2.size + w3_p.size)      # bf16 weights (resident)
        + 4 * (b1.size + b2.size + b3.size)          # f32 biases
        + 4 * batch * n_actions                      # f32 output (unpadded N)
    )

    out_p = pl.pallas_call(
        dqn_kernel,
        out_shape=jax.ShapeDtypeStruct((batch_p, n_actions), jnp.float32),
        grid=grid,
        in_specs=[
            pl.BlockSpec((tb, n_obs), lambda i: (i, 0)),   # x streams over batch
            const_spec((k_p, hidden)),                     # w1 (bf16, K-padded)
            const_spec((1, hidden)),                       # b1 (f32)
            const_spec((hidden, hidden)),                  # w2 (bf16)
            const_spec((1, hidden)),                       # b2 (f32)
            const_spec((hidden, n_p)),                     # w3 (bf16, N-padded)
            const_spec((1, n_actions)),                    # b3 (f32, unpadded)
        ],
        out_specs=pl.BlockSpec((tb, n_actions), lambda i: (i, 0)),
        scratch_shapes=[pltpu.VMEM((tb, k_p), jnp.bfloat16)],
        compiler_params=pltpu.CompilerParams(
            dimension_semantics=("parallel",),             # batch shards across TCs
        ),
        cost_estimate=pl.CostEstimate(
            flops=flops, transcendentals=0, bytes_accessed=bytes_accessed
        ),
    )(x_p, w1_p, b1, w2, b2, w3_p, b3)

    return out_p if batch_p == batch else out_p[:batch]


def init_params(key, n_observations, n_actions, hidden=HIDDEN):
    """Deterministic init mimicking PyTorch Linear (uniform +/- 1/sqrt(fan_in)).
    Weights are stored as (in_features, out_features)."""
    ks = jax.random.split(key, 6)

    def lin(kw, kb, fan_in, fan_out):
        bound = 1.0 / jnp.sqrt(float(fan_in))
        w = jax.random.uniform(kw, (fan_in, fan_out), jnp.float32, -bound, bound)
        b = jax.random.uniform(kb, (1, fan_out), jnp.float32, -bound, bound)
        return w, b

    w1, b1 = lin(ks[0], ks[1], n_observations, hidden)
    w2, b2 = lin(ks[2], ks[3], hidden, hidden)
    w3, b3 = lin(ks[4], ks[5], hidden, n_actions)
    return (w1, b1, w2, b2, w3, b3)


def dqn_reference(x, params):
    """Pure-JAX f32 reference for correctness check."""
    w1, b1, w2, b2, w3, b3 = params
    h1 = jnp.maximum(x @ w1 + b1, 0.0)
    h2 = jnp.maximum(h1 @ w2 + b2, 0.0)
    return h2 @ w3 + b3


if __name__ == "__main__":
    # CartPole-like shapes: n_observations=4, n_actions=2.
    n_observations, n_actions = 4, 2

    key = jax.random.PRNGKey(0)
    k_x1, k_x2, k_p = jax.random.split(key, 3)
    params = init_params(k_p, n_observations, n_actions)
    prepared = prepare_params(params)   # pad/cast weights once, outside the loop

    # Tolerances are loosened vs the f32 reference because the MXU runs in bf16.
    tol = dict(atol=5e-2, rtol=5e-2)

    # 1) Small inference-like batch (single grid step).
    x_small = jax.random.normal(k_x1, (8, n_observations), dtype=jnp.float32)
    out_small = jax.block_until_ready(dqn_forward(x_small, prepared))
    ref_small = jax.block_until_ready(dqn_reference(x_small, params))
    assert out_small.shape == (8, n_actions), out_small.shape
    assert jnp.allclose(out_small, ref_small, **tol), "small-batch mismatch"

    # 2) Replay-minibatch-sized batch: 1024 rows -> 2 grid steps of 512
    #    (exercises the streaming batch grid and the v7x two-step split).
    x_big = jax.random.normal(k_x2, (1024, n_observations), dtype=jnp.float32)
    out_big = jax.block_until_ready(dqn_forward(x_big, prepared))
    ref_big = jax.block_until_ready(dqn_reference(x_big, params))
    assert out_big.shape == (1024, n_actions), out_big.shape
    assert jnp.allclose(out_big, ref_big, **tol), "big-batch mismatch"

    print("KERNEL_OK")
</pallas_src>

<mosaic_0001>
module attributes {stable_mosaic.version = 11 : i64} {
  func.func @dqn_kernel(%arg0: i32, %arg1: memref<8x4xf32, #tpu.memory_space<vmem>>, %arg2: memref<128x128xbf16, #tpu.memory_space<vmem>>, %arg3: memref<1x128xf32, #tpu.memory_space<vmem>>, %arg4: memref<128x128xbf16, #tpu.memory_space<vmem>>, %arg5: memref<1x128xf32, #tpu.memory_space<vmem>>, %arg6: memref<128x128xbf16, #tpu.memory_space<vmem>>, %arg7: memref<1x2xf32, #tpu.memory_space<vmem>>, %arg8: memref<8x2xf32, #tpu.memory_space<vmem>>, %arg9: memref<8x128xbf16, #tpu.memory_space<vmem>>) attributes {dimension_semantics = [#tpu.dimension_semantics<parallel>], iteration_bounds = array<i64: 1>, scalar_prefetch = 0 : i64, scratch_operands = 1 : i64, tpu.core_type = #tpu.core_type<tc>, window_params = [{transform_indices = @transform_0, window_bounds = array<i64: 8, 4>}, {pipeline_mode = #tpu.pipeline_mode<synchronous>, transform_indices = @transform_1, window_bounds = array<i64: 128, 128>}, {pipeline_mode = #tpu.pipeline_mode<synchronous>, transform_indices = @transform_2, window_bounds = array<i64: 1, 128>}, {pipeline_mode = #tpu.pipeline_mode<synchronous>, transform_indices = @transform_3, window_bounds = array<i64: 128, 128>}, {pipeline_mode = #tpu.pipeline_mode<synchronous>, transform_indices = @transform_4, window_bounds = array<i64: 1, 128>}, {pipeline_mode = #tpu.pipeline_mode<synchronous>, transform_indices = @transform_5, window_bounds = array<i64: 128, 128>}, {pipeline_mode = #tpu.pipeline_mode<synchronous>, transform_indices = @transform_6, window_bounds = array<i64: 1, 2>}, {transform_indices = @transform_7, window_bounds = array<i64: 8, 2>}]} {
    %cst = arith.constant 0.000000e+00 : bf16
    %0 = vector.broadcast %cst : bf16 to vector<8x128xbf16>
    %c0 = arith.constant 0 : index
    %c0_0 = arith.constant 0 : index
    %1 = vector.load %arg9[%c0, %c0_0] : memref<8x128xbf16, #tpu.memory_space<vmem>>, vector<8x128xbf16>
    tpu.vector_store %arg9[%c0, %c0_0], %0 {strides = array<i32>} : memref<8x128xbf16, #tpu.memory_space<vmem>>, vector<8x128xbf16>,
    %c0_1 = arith.constant 0 : index
    %c0_2 = arith.constant 0 : index
    %2 = vector.load %arg1[%c0_1, %c0_2] : memref<8x4xf32, #tpu.memory_space<vmem>>, vector<8x4xf32>
    %3 = arith.truncf %2 : vector<8x4xf32> to vector<8x4xbf16>
    %c0_3 = arith.constant 0 : index
    %c0_4 = arith.constant 0 : index
    %4 = vector.load %arg9[%c0_3, %c0_4] : memref<8x128xbf16, #tpu.memory_space<vmem>>, vector<8x4xbf16>
    tpu.vector_store %arg9[%c0_3, %c0_4], %3 {strides = array<i32>} : memref<8x128xbf16, #tpu.memory_space<vmem>>, vector<8x4xbf16>,
    %c0_5 = arith.constant 0 : index
    %c0_6 = arith.constant 0 : index
    %5 = vector.load %arg9[%c0_5, %c0_6] : memref<8x128xbf16, #tpu.memory_space<vmem>>, vector<8x128xbf16>
    %c0_7 = arith.constant 0 : index
    %c0_8 = arith.constant 0 : index
    %6 = vector.load %arg2[%c0_7, %c0_8] : memref<128x128xbf16, #tpu.memory_space<vmem>>, vector<128x128xbf16>
    %cst_9 = arith.constant dense<0.000000e+00> : vector<8x128xf32>
    %7 = tpu.matmul %5, %6, %cst_9 {dimension_numbers = #tpu.dot_dimension_numbers<[1], [0], [0], [1], [0, 0, 1, 1], [], []>} : vector<8x128xbf16>, vector<128x128xbf16>, vector<8x128xf32> -> vector<8x128xf32>
    %c0_10 = arith.constant 0 : index
    %c0_11 = arith.constant 0 : index
    %8 = vector.load %arg3[%c0_10, %c0_11] : memref<1x128xf32, #tpu.memory_space<vmem>>, vector<1x128xf32>
    %9 = vector.broadcast %8 : vector<1x128xf32> to vector<8x128xf32>
    %10 = arith.addf %7, %9 : vector<8x128xf32>
    %cst_12 = arith.constant 0.000000e+00 : f32
    %11 = vector.broadcast %cst_12 : f32 to vector<8x128xf32>
    %12 = arith.maximumf %10, %11 : vector<8x128xf32>
    %13 = arith.truncf %12 : vector<8x128xf32> to vector<8x128xbf16>
    %c0_13 = arith.constant 0 : index
    %c0_14 = arith.constant 0 : index
    %14 = vector.load %arg4[%c0_13, %c0_14] : memref<128x128xbf16, #tpu.memory_space<vmem>>, vector<128x128xbf16>
    %cst_15 = arith.constant dense<0.000000e+00> : vector<8x128xf32>
    %15 = tpu.matmul %13, %14, %cst_15 {dimension_numbers = #tpu.dot_dimension_numbers<[1], [0], [0], [1], [0, 0, 1, 1], [], []>} : vector<8x128xbf16>, vector<128x128xbf16>, vector<8x128xf32> -> vector<8x128xf32>
    %c0_16 = arith.constant 0 : index
    %c0_17 = arith.constant 0 : index
    %16 = vector.load %arg5[%c0_16, %c0_17] : memref<1x128xf32, #tpu.memory_space<vmem>>, vector<1x128xf32>
    %17 = vector.broadcast %16 : vector<1x128xf32> to vector<8x128xf32>
    %18 = arith.addf %15, %17 : vector<8x128xf32>
    %cst_18 = arith.constant 0.000000e+00 : f32
    %19 = vector.broadcast %cst_18 : f32 to vector<8x128xf32>
    %20 = arith.maximumf %18, %19 : vector<8x128xf32>
    %21 = arith.truncf %20 : vector<8x128xf32> to vector<8x128xbf16>
    %c0_19 = arith.constant 0 : index
    %c0_20 = arith.constant 0 : index
    %22 = vector.load %arg6[%c0_19, %c0_20] : memref<128x128xbf16, #tpu.memory_space<vmem>>, vector<128x128xbf16>
    %cst_21 = arith.constant dense<0.000000e+00> : vector<8x128xf32>
    %23 = tpu.matmul %21, %22, %cst_21 {dimension_numbers = #tpu.dot_dimension_numbers<[1], [0], [0], [1], [0, 0, 1, 1], [], []>} : vector<8x128xbf16>, vector<128x128xbf16>, vector<8x128xf32> -> vector<8x128xf32>
    %24 = vector.extract_strided_slice %23 {offsets = [0, 0], sizes = [8, 2], strides = [1, 1]} : vector<8x128xf32> to vector<8x2xf32>
    %c0_22 = arith.constant 0 : index
    %c0_23 = arith.constant 0 : index
    %25 = vector.load %arg7[%c0_22, %c0_23] : memref<1x2xf32, #tpu.memory_space<vmem>>, vector<1x2xf32>
    %26 = vector.broadcast %25 : vector<1x2xf32> to vector<8x2xf32>
    %27 = arith.addf %24, %26 : vector<8x2xf32>
    %c0_24 = arith.constant 0 : index
    %c0_25 = arith.constant 0 : index
    %28 = vector.load %arg8[%c0_24, %c0_25] : memref<8x2xf32, #tpu.memory_space<vmem>>, vector<8x2xf32>
    tpu.vector_store %arg8[%c0_24, %c0_25], %27 {strides = array<i32>} : memref<8x2xf32, #tpu.memory_space<vmem>>, vector<8x2xf32>,
    return
  }
  func.func @transform_0(%arg0: i32) -> (i32, i32) {
    %c0_i32 = arith.constant 0 : i32
    %c0_i32_0 = arith.constant 0 : i32
    return %arg0, %c0_i32 : i32, i32
  }
  func.func @transform_1(%arg0: i32) -> (i32, i32) {
    %c0_i32 = arith.constant 0 : i32
    %c0_i32_0 = arith.constant 0 : i32
    %c0_i32_1 = arith.constant 0 : i32
    return %c0_i32, %c0_i32_0 : i32, i32
  }
  func.func @transform_2(%arg0: i32) -> (i32, i32) {
    %c0_i32 = arith.constant 0 : i32
    %c0_i32_0 = arith.constant 0 : i32
    %c0_i32_1 = arith.constant 0 : i32
    return %c0_i32, %c0_i32_0 : i32, i32
  }
  func.func @transform_3(%arg0: i32) -> (i32, i32) {
    %c0_i32 = arith.constant 0 : i32
    %c0_i32_0 = arith.constant 0 : i32
    %c0_i32_1 = arith.constant 0 : i32
    return %c0_i32, %c0_i32_0 : i32, i32
  }
  func.func @transform_4(%arg0: i32) -> (i32, i32) {
    %c0_i32 = arith.constant 0 : i32
    %c0_i32_0 = arith.constant 0 : i32
    %c0_i32_1 = arith.constant 0 : i32
    return %c0_i32, %c0_i32_0 : i32, i32
  }
  func.func @transform_5(%arg0: i32) -> (i32, i32) {
    %c0_i32 = arith.constant 0 : i32
    %c0_i32_0 = arith.constant 0 : i32
    %c0_i32_1 = arith.constant 0 : i32
    return %c0_i32, %c0_i32_0 : i32, i32
  }
  func.func @transform_6(%arg0: i32) -> (i32, i32) {
    %c0_i32 = arith.constant 0 : i32
    %c0_i32_0 = arith.constant 0 : i32
    %c0_i32_1 = arith.constant 0 : i32
    return %c0_i32, %c0_i32_0 : i32, i32
  }
  func.func @transform_7(%arg0: i32) -> (i32, i32) {
    %c0_i32 = arith.constant 0 : i32
    %c0_i32_0 = arith.constant 0 : i32
    return %arg0, %c0_i32 : i32, i32
  }
}

</mosaic_0001>

<llo_original>
// kernel: dqn_forward.1
$region0: #{dqn_forward.1}
  #allocation0 [shape = 'u32[]', space=smem, size = 0x4, offset = 0x4, fixed_abs, tag = 'smem constant byte address 0x4 - core index']
  #allocation1 [shape = 'u32[144,128]{1,0:T(1,128)}', space=vmem, size = 0x12000, scoped, tag = 'internal scratch']
  #allocation2 [shape = 'bf16[8,128]{1,0:T(8,128)(2,1)}', space=vmem, size = 0x800, scoped, tag = 'scratch operand']
  %s0 = inlined_call_operand.vmem [shape: f32[8,4], index: 0, kind: input, shape index: {}]
  %s1 = inlined_call_operand.hbm [shape: bf16[128,128], index: 1, kind: input, shape index: {}]
  %s2 = inlined_call_operand.vmem [shape: f32[1,128], index: 2, kind: input, shape index: {}]
  %s3 = inlined_call_operand.hbm [shape: bf16[128,128], index: 3, kind: input, shape index: {}]
  %s4 = inlined_call_operand.vmem [shape: f32[1,128], index: 4, kind: input, shape index: {}]
  %s5 = inlined_call_operand.hbm [shape: bf16[128,128], index: 5, kind: input, shape index: {}]
  %s6 = inlined_call_operand.vmem [shape: f32[1,2], index: 6, kind: input, shape index: {}]
  %s7 = inlined_call_operand.vmem [shape: f32[8,2], index: 7, kind: output, shape index: {}]
  %s8 = sld [smem:[#allocation0]]
  $region50: #{dqn_forward.1} parent=0
    _
  %s10 = ssub.s32 1, %s8
  %s11 = scalar_select 0, %s10, %s8
  $region1: #{dqn_forward.1} parent=0
    #allocation3 [shape = 'u8[32768]{0}', space=vmem, size = 0x8000, scoped, tag = 'input window, operand 1, single buffered']
    #allocation4 [shape = 's32[1]{0}', space=sflag, size = 0x4, scoped, tag = 'scoped memory for dqn_forward.1']
    #allocation5 [shape = 'u8[32768]{0}', space=vmem, size = 0x8000, scoped, tag = 'input window, operand 3, single buffered']
    #allocation6 [shape = 's32[1]{0}', space=sflag, size = 0x4, scoped, tag = 'scoped memory for dqn_forward.1']
    #allocation7 [shape = 'u8[32768]{0}', space=vmem, size = 0x8000, scoped, tag = 'input window, operand 5, single buffered']
    %12 = vsyncpa [#allocation4], 0
    %13 = vsyncpa [#allocation6], 0
    // Predicated region
    $region2: #{dqn_forward.1} parent=1 // pred_check
      _
    $region3: #{dqn_forward.1} parent=1 // pred_check_branch
      %15 = sbr.rel (0) target = $region5
    $region4: #{dqn_forward.1} parent=1 // pred_region
      _
    $region5: #{dqn_forward.1} parent=1 // pred_fallthru
      _
    // Predicated region
    $region6: #{dqn_forward.1} parent=1 // pred_check
      _
    $region7: #{dqn_forward.1} parent=1 // pred_check_branch
      %17 = sbr.rel (0) target = $region9
    $region8: #{dqn_forward.1} parent=1 // pred_region
      %s19 = ssub.s32 1024, 1024
      %20 = vsyncadd [#allocation4], %s19
      %s21 = sshll.u32 [#allocation3], 4
      %s22 = int_to_ptr.vmem [resolvable:$true] %s21
      %27 = dma.hbm_to_vmem [thread:$0]  %s1, 1024, %s22, [#allocation4], 64, 64, 4
    $region9: #{dqn_forward.1} parent=1 // pred_fallthru
      _
    // Predicated region
    $region10: #{dqn_forward.1} parent=1 // pred_check
      _
    $region11: #{dqn_forward.1} parent=1 // pred_check_branch
      %29 = sbr.rel (0) target = $region13
    $region12: #{dqn_forward.1} parent=1 // pred_region
      _
    $region13: #{dqn_forward.1} parent=1 // pred_fallthru
      _
    // Predicated region
    $region14: #{dqn_forward.1} parent=1 // pred_check
      _
    $region15: #{dqn_forward.1} parent=1 // pred_check_branch
      %31 = sbr.rel (0) target = $region17
    $region16: #{dqn_forward.1} parent=1 // pred_region
      %s33 = ssub.s32 1024, 1024
      %34 = vsyncadd [#allocation6], %s33
      %s35 = sshll.u32 [#allocation5], 4
      %s36 = int_to_ptr.vmem [resolvable:$true] %s35
      %41 = dma.hbm_to_vmem [thread:$0]  %s3, 1024, %s36, [#allocation6], 64, 64, 4
    $region17: #{dqn_forward.1} parent=1 // pred_fallthru
      _
    // Predicated region
    $region18: #{dqn_forward.1} parent=1 // pred_check
      _
    $region19: #{dqn_forward.1} parent=1 // pred_check_branch
      %43 = sbr.rel (0) target = $region21
    $region20: #{dqn_forward.1} parent=1 // pred_region
      _
    $region21: #{dqn_forward.1} parent=1 // pred_fallthru
      _
    // Predicated region
    $region22: #{dqn_forward.1} parent=1 // pred_check
      _
    $region23: #{dqn_forward.1} parent=1 // pred_check_branch
      %45 = sbr.rel (0) target = $region25
    $region24: #{dqn_forward.1} parent=1 // pred_region
      %s47 = ssub.s32 1024, 1024
      %48 = vsyncadd [#allocation6], %s47
      %s49 = sshll.u32 [#allocation7], 4
      %s50 = int_to_ptr.vmem [resolvable:$true] %s49
      %55 = dma.hbm_to_vmem [thread:$0]  %s5, 1024, %s50, [#allocation6], 64, 64, 4
    $region25: #{dqn_forward.1} parent=1 // pred_fallthru
      _
    // Predicated region
    $region26: #{dqn_forward.1} parent=1 // pred_check
      _
    $region27: #{dqn_forward.1} parent=1 // pred_check_branch
      %57 = sbr.rel (0) target = $region29
    $region28: #{dqn_forward.1} parent=1 // pred_region
      _
    $region29: #{dqn_forward.1} parent=1 // pred_fallthru
      _
    // Predicated region
    $region30: #{dqn_forward.1} parent=1 // pred_check
      _
    $region31: #{dqn_forward.1} parent=1 // pred_check_branch
      %59 = sbr.rel (0) target = $region33
    $region32: #{dqn_forward.1} parent=1 // pred_region
      %60 = dma.done [#allocation4], 1024
    $region33: #{dqn_forward.1} parent=1 // pred_fallthru
      _
    // Predicated region
    $region34: #{dqn_forward.1} parent=1 // pred_check
      _
    $region35: #{dqn_forward.1} parent=1 // pred_check_branch
      %62 = sbr.rel (0) target = $region37
    $region36: #{dqn_forward.1} parent=1 // pred_region
      %63 = dma.done [#allocation6], 1024
    $region37: #{dqn_forward.1} parent=1 // pred_fallthru
      _
    // Predicated region
    $region38: #{dqn_forward.1} parent=1 // pred_check
      _
    $region39: #{dqn_forward.1} parent=1 // pred_check_branch
      %65 = sbr.rel (0) target = $region41
    $region40: #{dqn_forward.1} parent=1 // pred_region
      %66 = dma.done [#allocation6], 1024
    $region41: #{dqn_forward.1} parent=1 // pred_fallthru
      _
    %68 = vst [vmem:[#allocation2] sm:$0xf] 0
    %v69 = vld [vmem:[%s0] sm:$0xff]
    %v70 = vpack.c.bf16 %v69, %v69
    %vm71 = vcmask 27648
    %72 = vst.msk [vmem:[#allocation2] sm:$0xf] %vm71, %v70
    %v73 = vld [vmem:[#allocation2] sm:$0xf]
    %v74 = vld [vmem:[#allocation3] sm:$0xf]
    %v75 = vld [vmem:[#allocation3 + $0x4] sm:$0xf]
    %v76 = vld [vmem:[#allocation3 + $0x8] sm:$0xf]
    %v77 = vld [vmem:[#allocation3 + $0xc] sm:$0xf]
    %v78 = vld [vmem:[#allocation3 + $0x10] sm:$0xf]
    %v79 = vld [vmem:[#allocation3 + $0x14] sm:$0xf]
    %v80 = vld [vmem:[#allocation3 + $0x18] sm:$0xf]
    %v81 = vld [vmem:[#allocation3 + $0x1c] sm:$0xf]
    %v82 = vld [vmem:[#allocation3 + $0x20] sm:$0xf]
    %v83 = vld [vmem:[#allocation3 + $0x24] sm:$0xf]
    %v84 = vld [vmem:[#allocation3 + $0x28] sm:$0xf]
    %v85 = vld [vmem:[#allocation3 + $0x2c] sm:$0xf]
    %v86 = vld [vmem:[#allocation3 + $0x30] sm:$0xf]
    %v87 = vld [vmem:[#allocation3 + $0x34] sm:$0xf]
    %v88 = vld [vmem:[#allocation3 + $0x38] sm:$0xf]
    %v89 = vld [vmem:[#allocation3 + $0x3c] sm:$0xf]
    %v90 = vld [vmem:[%s2] sm:$0x1]
    %v92 = vlaneseq
    %v93 = vshrl.u32 %v92, 7
    %v94 = vsub.s32 0, %v93
    %v95 = vrot.slane %v90, %v94
    %v113 = vunpack.c.l.b16 %v74
    %v114 = vunpack.c.l.b16 %v75
    %v115 = vunpack.c.l.b16 %v76
    %v116 = vunpack.c.l.b16 %v77
    %v117 = vunpack.c.l.b16 %v78
    %v118 = vunpack.c.l.b16 %v79
    %v119 = vunpack.c.l.b16 %v80
    %v120 = vunpack.c.l.b16 %v81
    %v121 = vunpack.c.l.b16 %v82
    %v122 = vunpack.c.l.b16 %v83
    %v123 = vunpack.c.l.b16 %v84
    %v124 = vunpack.c.l.b16 %v85
    %v125 = vunpack.c.l.b16 %v86
    %v126 = vunpack.c.l.b16 %v87
    %v127 = vunpack.c.l.b16 %v88
    %v128 = vunpack.c.l.b16 %v89
    %v129 = vpack.c.b16 %v114, %v113
    %v130 = vpack.c.b16 %v116, %v115
    %v131 = vpack.c.b16 %v118, %v117
    %v132 = vpack.c.b16 %v120, %v119
    %v133 = vpack.c.b16 %v122, %v121
    %v134 = vpack.c.b16 %v124, %v123
    %v135 = vpack.c.b16 %v126, %v125
    %v136 = vpack.c.b16 %v128, %v127
    %145 = vmatprep.subr.bf16.mxu0 0
    %146 = vmatpush1.bf16.msra.mxu0 %v129
    %147 = vmatprep.subr.bf16.mxu0 0
    %148 = vmatpush1.bf16.msra.mxu0 %v130
    %149 = vmatprep.subr.bf16.mxu0 0
    %150 = vmatpush1.bf16.msra.mxu0 %v131
    %151 = vmatprep.subr.bf16.mxu0 0
    %152 = vmatpush1.bf16.msra.mxu0 %v132
    %153 = vmatprep.subr.bf16.mxu0 0
    %154 = vmatpush1.bf16.msra.mxu0 %v133
    %155 = vmatprep.subr.bf16.mxu0 0
    %156 = vmatpush1.bf16.msra.mxu0 %v134
    %157 = vmatprep.subr.bf16.mxu0 0
    %158 = vmatpush1.bf16.msra.mxu0 %v135
    %159 = vmatprep.subr.bf16.mxu0 0
    %160 = vmatpush1.bf16.msra.mxu0 %v136
    %161 = vmatprep.subr.bf16.mxu0 0
    %162 = vmatpush1.bf16.msra.mxu0 0
    %163 = vmatprep.subr.bf16.mxu0 0
    %164 = vmatpush1.bf16.msra.mxu0 0
    %165 = vmatprep.subr.bf16.mxu0 0
    %166 = vmatpush1.bf16.msra.mxu0 0
    %167 = vmatprep.subr.bf16.mxu0 0
    %168 = vmatpush1.bf16.msra.mxu0 0
    %169 = vmatprep.subr.bf16.mxu0 0
    %170 = vmatpush1.bf16.msra.mxu0 0
    %171 = vmatprep.subr.bf16.mxu0 0
    %172 = vmatpush1.bf16.msra.mxu0 0
    %173 = vmatprep.subr.bf16.mxu0 0
    %174 = vmatpush1.bf16.msra.mxu0 0
    %175 = vmatprep.subr.bf16.mxu0 0
    %176 = vmatpush1.bf16.msra.mxu0 0
    %177 = vmatprep.mubr.bf16.mxu0 0
    %178 = vmatmul.mubr.bf16.gmra.mrb[0].mxu0 %v73
    %v179 = vpop.f32.mrb[0].mxu0
    %v180 = vadd.f32 %v95, %v179
    %v181 = vpop.f32.mrb[0].mxu0
    %v182 = vpop.f32.mrb[0].mxu0
    %v183 = vpop.f32.mrb[0].mxu0
    %184 = vdwg.mxu0
    %v185 = vmax.f32 %v180, 0.0
    %v186 = vpack.c.bf16 %v185, %v185
    %v187 = vld [vmem:[#allocation5] sm:$0xf]
    %v188 = vld [vmem:[#allocation5 + $0x4] sm:$0xf]
    %v189 = vld [vmem:[#allocation5 + $0x8] sm:$0xf]
    %v190 = vld [vmem:[#allocation5 + $0xc] sm:$0xf]
    %v191 = vld [vmem:[#allocation5 + $0x10] sm:$0xf]
    %v192 = vld [vmem:[#allocation5 + $0x14] sm:$0xf]
    %v193 = vld [vmem:[#allocation5 + $0x18] sm:$0xf]
    %v194 = vld [vmem:[#allocation5 + $0x1c] sm:$0xf]
    %v195 = vld [vmem:[#allocation5 + $0x20] sm:$0xf]
    %v196 = vld [vmem:[#allocation5 + $0x24] sm:$0xf]
    %v197 = vld [vmem:[#allocation5 + $0x28] sm:$0xf]
    %v198 = vld [vmem:[#allocation5 + $0x2c] sm:$0xf]
    %v199 = vld [vmem:[#allocation5 + $0x30] sm:$0xf]
    %v200 = vld [vmem:[#allocation5 + $0x34] sm:$0xf]
    %v201 = vld [vmem:[#allocation5 + $0x38] sm:$0xf]
    %v202 = vld [vmem:[#allocation5 + $0x3c] sm:$0xf]
    %v203 = vld [vmem:[%s4] sm:$0x1]
    %v205 = vlaneseq
    %v206 = vshrl.u32 %v205, 7
    %v207 = vsub.s32 0, %v206
    %v208 = vrot.slane %v203, %v207
    %v226 = vunpack.c.l.b16 %v187
    %v227 = vunpack.c.l.b16 %v188
    %v228 = vunpack.c.l.b16 %v189
    %v229 = vunpack.c.l.b16 %v190
    %v230 = vunpack.c.l.b16 %v191
    %v231 = vunpack.c.l.b16 %v192
    %v232 = vunpack.c.l.b16 %v193
    %v233 = vunpack.c.l.b16 %v194
    %v234 = vunpack.c.l.b16 %v195
    %v235 = vunpack.c.l.b16 %v196
    %v236 = vunpack.c.l.b16 %v197
    %v237 = vunpack.c.l.b16 %v198
    %v238 = vunpack.c.l.b16 %v199
    %v239 = vunpack.c.l.b16 %v200
    %v240 = vunpack.c.l.b16 %v201
    %v241 = vunpack.c.l.b16 %v202
    %v242 = vpack.c.b16 %v227, %v226
    %v243 = vpack.c.b16 %v229, %v228
    %v244 = vpack.c.b16 %v231, %v230
    %v245 = vpack.c.b16 %v233, %v232
    %v246 = vpack.c.b16 %v235, %v234
    %v247 = vpack.c.b16 %v237, %v236
    %v248 = vpack.c.b16 %v239, %v238
    %v249 = vpack.c.b16 %v241, %v240
    %258 = vmatprep.subr.bf16.mxu0 0
    %259 = vmatpush1.bf16.msra.mxu0 %v242
    %260 = vmatprep.subr.bf16.mxu0 0
    %261 = vmatpush1.bf16.msra.mxu0 %v243
    %262 = vmatprep.subr.bf16.mxu0 0
    %263 = vmatpush1.bf16.msra.mxu0 %v244
    %264 = vmatprep.subr.bf16.mxu0 0
    %265 = vmatpush1.bf16.msra.mxu0 %v245
    %266 = vmatprep.subr.bf16.mxu0 0
    %267 = vmatpush1.bf16.msra.mxu0 %v246
    %268 = vmatprep.subr.bf16.mxu0 0
    %269 = vmatpush1.bf16.msra.mxu0 %v247
    %270 = vmatprep.subr.bf16.mxu0 0
    %271 = vmatpush1.bf16.msra.mxu0 %v248
    %272 = vmatprep.subr.bf16.mxu0 0
    %273 = vmatpush1.bf16.msra.mxu0 %v249
    %274 = vmatprep.subr.bf16.mxu0 0
    %275 = vmatpush1.bf16.msra.mxu0 0
    %276 = vmatprep.subr.bf16.mxu0 0
    %277 = vmatpush1.bf16.msra.mxu0 0
    %278 = vmatprep.subr.bf16.mxu0 0
    %279 = vmatpush1.bf16.msra.mxu0 0
    %280 = vmatprep.subr.bf16.mxu0 0
    %281 = vmatpush1.bf16.msra.mxu0 0
    %282 = vmatprep.subr.bf16.mxu0 0
    %283 = vmatpush1.bf16.msra.mxu0 0
    %284 = vmatprep.subr.bf16.mxu0 0
    %285 = vmatpush1.bf16.msra.mxu0 0
    %286 = vmatprep.subr.bf16.mxu0 0
    %287 = vmatpush1.bf16.msra.mxu0 0
    %288 = vmatprep.subr.bf16.mxu0 0
    %289 = vmatpush1.bf16.msra.mxu0 0
    %290 = vmatprep.mubr.bf16.mxu0 0
    %291 = vmatmul.mubr.bf16.gmra.mrb[0].mxu0 %v186
    %v292 = vpop.f32.mrb[0].mxu0
    %v293 = vadd.f32 %v208, %v292
    %v294 = vpop.f32.mrb[0].mxu0
    %v295 = vpop.f32.mrb[0].mxu0
    %v296 = vpop.f32.mrb[0].mxu0
    %297 = vdwg.mxu0
    %v298 = vmax.f32 %v293, 0.0
    %v299 = vpack.c.bf16 %v298, %v298
    %v300 = vld [vmem:[#allocation7] sm:$0xf]
    %v301 = vld [vmem:[#allocation7 + $0x4] sm:$0xf]
    %v302 = vld [vmem:[#allocation7 + $0x8] sm:$0xf]
    %v303 = vld [vmem:[#allocation7 + $0xc] sm:$0xf]
    %v304 = vld [vmem:[#allocation7 + $0x10] sm:$0xf]
    %v305 = vld [vmem:[#allocation7 + $0x14] sm:$0xf]
    %v306 = vld [vmem:[#allocation7 + $0x18] sm:$0xf]
    %v307 = vld [vmem:[#allocation7 + $0x1c] sm:$0xf]
    %v308 = vld [vmem:[#allocation7 + $0x20] sm:$0xf]
    %v309 = vld [vmem:[#allocation7 + $0x24] sm:$0xf]
    %v310 = vld [vmem:[#allocation7 + $0x28] sm:$0xf]
    %v311 = vld [vmem:[#allocation7 + $0x2c] sm:$0xf]
    %v312 = vld [vmem:[#allocation7 + $0x30] sm:$0xf]
    %v313 = vld [vmem:[#allocation7 + $0x34] sm:$0xf]
    %v314 = vld [vmem:[#allocation7 + $0x38] sm:$0xf]
    %v315 = vld [vmem:[#allocation7 + $0x3c] sm:$0xf]
    %v332 = vunpack.c.l.b16 %v300
    %v333 = vunpack.c.l.b16 %v301
    %v334 = vunpack.c.l.b16 %v302
    %v335 = vunpack.c.l.b16 %v303
    %v336 = vunpack.c.l.b16 %v304
    %v337 = vunpack.c.l.b16 %v305
    %v338 = vunpack.c.l.b16 %v306
    %v339 = vunpack.c.l.b16 %v307
    %v340 = vunpack.c.l.b16 %v308
    %v341 = vunpack.c.l.b16 %v309
    %v342 = vunpack.c.l.b16 %v310
    %v343 = vunpack.c.l.b16 %v311
    %v344 = vunpack.c.l.b16 %v312
    %v345 = vunpack.c.l.b16 %v313
    %v346 = vunpack.c.l.b16 %v314
    %v347 = vunpack.c.l.b16 %v315
    %v348 = vpack.c.b16 %v333, %v332
    %v349 = vpack.c.b16 %v335, %v334
    %v350 = vpack.c.b16 %v337, %v336
    %v351 = vpack.c.b16 %v339, %v338
    %v352 = vpack.c.b16 %v341, %v340
    %v353 = vpack.c.b16 %v343, %v342
    %v354 = vpack.c.b16 %v345, %v344
    %v355 = vpack.c.b16 %v347, %v346
    %364 = vmatprep.subr.bf16.mxu0 0
    %365 = vmatpush1.bf16.msra.mxu0 %v348
    %366 = vmatprep.subr.bf16.mxu0 0
    %367 = vmatpush1.bf16.msra.mxu0 %v349
    %368 = vmatprep.subr.bf16.mxu0 0
    %369 = vmatpush1.bf16.msra.mxu0 %v350
    %370 = vmatprep.subr.bf16.mxu0 0
    %371 = vmatpush1.bf16.msra.mxu0 %v351
    %372 = vmatprep.subr.bf16.mxu0 0
    %373 = vmatpush1.bf16.msra.mxu0 %v352
    %374 = vmatprep.subr.bf16.mxu0 0
    %375 = vmatpush1.bf16.msra.mxu0 %v353
    %376 = vmatprep.subr.bf16.mxu0 0
    %377 = vmatpush1.bf16.msra.mxu0 %v354
    %378 = vmatprep.subr.bf16.mxu0 0
    %379 = vmatpush1.bf16.msra.mxu0 %v355
    %380 = vmatprep.subr.bf16.mxu0 0
    %381 = vmatpush1.bf16.msra.mxu0 0
    %382 = vmatprep.subr.bf16.mxu0 0
    %383 = vmatpush1.bf16.msra.mxu0 0
    %384 = vmatprep.subr.bf16.mxu0 0
    %385 = vmatpush1.bf16.msra.mxu0 0
    %386 = vmatprep.subr.bf16.mxu0 0
    %387 = vmatpush1.bf16.msra.mxu0 0
    %388 = vmatprep.subr.bf16.mxu0 0
    %389 = vmatpush1.bf16.msra.mxu0 0
    %390 = vmatprep.subr.bf16.mxu0 0
    %391 = vmatpush1.bf16.msra.mxu0 0
    %392 = vmatprep.subr.bf16.mxu0 0
    %393 = vmatpush1.bf16.msra.mxu0 0
    %394 = vmatprep.subr.bf16.mxu0 0
    %395 = vmatpush1.bf16.msra.mxu0 0
    %396 = vmatprep.mubr.bf16.mxu0 0
    %397 = vmatmul.mubr.bf16.gmra.mrb[0].mxu0 %v299
    %v398 = vpop.f32.mrb[0].mxu0
    %v399 = vadd.f32 0.0, %v398
    %v400 = vpop.f32.mrb[0].mxu0
    %v401 = vpop.f32.mrb[0].mxu0
    %v402 = vpop.f32.mrb[0].mxu0
    %403 = vdwg.mxu0
    %v404 = vld [vmem:[%s6] sm:$0x1]
    %v406 = vlaneseq
    %v407 = vshrl.u32 %v406, 7
    %v408 = vsub.s32 0, %v407
    %v409 = vrot.slane %v404, %v408
    %v411 = vadd.f32 %v399, %v409
    %vm412 = vcmask 15360
    %413 = vst.msk [vmem:[%s7] sm:$0xff] %vm412, %v411
    // Predicated region
    $region42: #{dqn_forward.1} parent=1 // pred_check
      _
    $region43: #{dqn_forward.1} parent=1 // pred_check_branch
      %415 = sbr.rel (0) target = $region45
    $region44: #{dqn_forward.1} parent=1 // pred_region
      _
    $region45: #{dqn_forward.1} parent=1 // pred_fallthru
      _
    // Predicated region
    $region46: #{dqn_forward.1} parent=1 // pred_check
      _
    $region47: #{dqn_forward.1} parent=1 // pred_check_branch
      %417 = sbr.rel (0) target = $region49
    $region48: #{dqn_forward.1} parent=1 // pred_region
      _
    $region49: #{dqn_forward.1} parent=1 // pred_fallthru
      _
    %418 = vsyncpa [#allocation4], 1
    %419 = vsyncpa [#allocation6], 1

</llo_original>
